<compile_context>
chip_gen: v5e
topology: v5e:2x2
jax: 0.10.0
libtpu: 0.0.40
codegen_flags: <defaults>
</compile_context>

<pallas_src>
import functools
import numpy as np
import jax
import jax.numpy as jnp
from jax import lax
from jax.experimental import pallas as pl
from jax.experimental.pallas import tpu as pltpu


def _round_up(x, m):
    return (x + m - 1) // m * m


def _erf(x):
    # Abramowitz & Stegun 7.1.26 (|abs err| < 1.5e-7); plain VPU/EUP ops only.
    a1, a2, a3, a4, a5 = 0.254829592, -0.284496736, 1.421413741, -1.453152027, 1.061405429
    p = 0.3275911
    s = jnp.where(x < 0, -1.0, 1.0)
    ax = jnp.abs(x)
    t = 1.0 / (1.0 + p * ax)
    poly = ((((a5 * t + a4) * t + a3) * t + a2) * t + a1) * t
    return s * (1.0 - poly * jnp.exp(-ax * ax))


def _gelu(x):
    # exact GELU (matches torch.nn.GELU() default) up to the erf approximation
    return 0.5 * x * (1.0 + _erf(x * np.float32(1.0 / np.sqrt(2.0))))


def _sigmoid(x):
    return 1.0 / (1.0 + jnp.exp(-x))


def _stage_denoiser_kernel(x_ref, wa_ref, wb_ref, w1_ref, ml_ref, mr_ref,
                           out_ref, pbuf_ref, *, H, W, Cp, Nb):
    f32 = jnp.float32
    S = H * W
    Wp = W + 1                       # flat halo on each side of one image
    Spad = S + 2 * Wp                # per-image padded flat extent

    # Zero the flat-padded buffer once: halos stay zero for both conv stages
    # (only the centres are rewritten by im2col).  Deliberately unconditional
    # -- do NOT guard on program_id under 'parallel' megacore sharding.
    pbuf_ref[...] = jnp.zeros_like(pbuf_ref)

    # Precomputed column masks (hoisted to the wrapper): a flat shift by
    # (dy-1)*W + (dx-1) bleeds across row edges; these zero the columns that
    # correspond to the horizontal zero padding.
    mask_l = ml_ref[...]             # applied to dx == 0 taps
    mask_r = mr_ref[...]             # applied to dx == 2 taps
    col_mask = {0: mask_l, 1: None, 2: mask_r}

    def im2col(v):
        # v: (Cp, Nb*S).  Return the (9*Cp, Nb*S) slab of zero-padded 3x3
        # taps as a VALUE (rows ordered tap-major: (dy*3+dx)*Cp + ci).
        for i in range(Nb):
            base = i * Spad + Wp
            pbuf_ref[:, base:base + S] = v[:, i * S:(i + 1) * S]
        taps = []
        for dy in range(3):
            for dx in range(3):
                off = (dy - 1) * W + (dx - 1)
                parts = [pbuf_ref[:, i * Spad + Wp + off:i * Spad + Wp + off + S]
                         for i in range(Nb)]
                t = parts[0] if Nb == 1 else jnp.concatenate(parts, axis=1)
                m = col_mask[dx]
                if m is not None:
                    t = t * m
                taps.append(t)
        return jnp.concatenate(taps, axis=0)              # (9*Cp, Nb*S)

    if Nb == 1:
        x = x_ref[0].astype(f32)                          # (Cp, S)
    else:
        x = jnp.concatenate([x_ref[i].astype(f32) for i in range(Nb)], axis=1)

    # ---- stage 1: conv3 (+GELU) and depthwise convd3 (+Sigmoid, +x) --------
    # wa = [conv3_mat ; convd3_blockdiag] -> one (2Cp, 9Cp) x (9Cp, Nb*S) dot.
    pre1 = jnp.dot(wa_ref[...], im2col(x), preferred_element_type=f32)
    x1 = _gelu(pre1[:Cp])                                 # tile-aligned slices
    x2 = _sigmoid(pre1[Cp:]) + x
    x_mid = x1 * x2

    # ---- stage 2: depthwise convd33 (+Sigmoid, +x_mid) and conv33 (+GELU) --
    pre2 = jnp.dot(wb_ref[...], im2col(x_mid), preferred_element_type=f32)
    x3 = _sigmoid(pre2[:Cp]) + x_mid
    x33 = _gelu(pre2[Cp:])

    # ---- conv1 (1x1): single matmul on the sublane-stacked [x3 ; x33] ------
    y = jnp.dot(w1_ref[...], jnp.concatenate([x3, x33], axis=0),
                preferred_element_type=f32)               # (C_out_p, Nb*S)

    for i in range(Nb):
        out_ref[i] = y[:, i * S:(i + 1) * S].astype(out_ref.dtype)


def _num_grid_blocks(N):
    """2 'parallel' grid slices on 2-TensorCore chips (v4/v5p/v7x) when the
    batch splits evenly; otherwise fold the whole batch into one grid step
    (v5e/v6e are single-TC: per-step grid overhead dominates at these sizes)."""
    if N < 2 or N % 2 != 0:
        return 1
    try:
        kind = jax.devices()[0].device_kind.lower()
    except Exception:
        return 2
    single_tc = any(tag in kind for tag in ("lite", "v5e", "v6e", "v6"))
    return 1 if single_tc else 2


def stage_denoiser(x, w3, wd3, w33, wd33, w1):
    """x: (N, C, H, W) NCHW.  Weights in PyTorch layouts:
       w3, w33: (C, C, 3, 3) OIHW; wd3, wd33: (C, 1, 3, 3); w1: (C_out, 2C, 1, 1)."""
    N, C, H, W = x.shape
    C_out = w1.shape[0]
    S = H * W
    Cp = _round_up(C, 8)            # pad channels to the f32 sublane granule
    Cop = _round_up(C_out, 8)

    G = _num_grid_blocks(N)         # grid slices (parallel across TensorCores)
    Nb = N // G                     # images folded onto the lane axis per step

    def full_mat(w):
        # padded OIHW (Cp, Cp, 3, 3) -> (Cp, 9*Cp), col index (dy*3+dx)*Cp + ci
        return jnp.transpose(w, (0, 2, 3, 1)).reshape(Cp, 9 * Cp)

    def dw_mat(w):
        # padded depthwise (Cp, 1, 3, 3) -> block-"diagonal" (Cp, 9*Cp) so the
        # depthwise conv joins the same im2col matmul.
        wf = jnp.transpose(w[:, 0], (1, 2, 0)).reshape(9, Cp)      # [tap, c]
        eye = jnp.eye(Cp, dtype=w.dtype)
        return (wf.T[:, :, None] * eye[:, None, :]).reshape(Cp, 9 * Cp)

    pad_full = lambda w: jnp.pad(w, ((0, Cp - C), (0, Cp - C), (0, 0), (0, 0)))
    pad_dw = lambda w: jnp.pad(w, ((0, Cp - C), (0, 0), (0, 0), (0, 0)))

    wa = jnp.concatenate([full_mat(pad_full(w3)), dw_mat(pad_dw(wd3))], axis=0)   # (2Cp, 9Cp)
    wb = jnp.concatenate([dw_mat(pad_dw(wd33)), full_mat(pad_full(w33))], axis=0) # (2Cp, 9Cp)

    # 1x1 conv: (C_out, 2C, 1, 1) -> (Cop, 2*Cp).  Padded x3 channels carry
    # sigmoid(0)=0.5, so their weight columns MUST be zero (zero init below).
    w1f = w1[:, :, 0, 0]
    w1m = jnp.zeros((Cop, 2 * Cp), w1.dtype)
    w1m = w1m.at[:C_out, :C].set(w1f[:, :C])
    w1m = w1m.at[:C_out, Cp:Cp + C].set(w1f[:, C:])

    # zero-pad input channels; contiguous reshape to lane-dense (Cp, S)
    x2d = jnp.pad(x.reshape(N, C, S), ((0, 0), (0, Cp - C), (0, 0)))

    # column masks, precomputed once (hoisted out of the kernel)
    col = jnp.arange(Nb * S, dtype=jnp.int32) % W
    mask_l = jnp.broadcast_to((col > 0).astype(jnp.float32), (Cp, Nb * S))
    mask_r = jnp.broadcast_to((col < (W - 1)).astype(jnp.float32), (Cp, Nb * S))

    kernel = functools.partial(_stage_denoiser_kernel, H=H, W=W, Cp=Cp, Nb=Nb)
    out = pl.pallas_call(
        kernel,
        out_shape=jax.ShapeDtypeStruct((N, Cop, S), x.dtype),
        grid=(G,),
        in_specs=[
            pl.BlockSpec((Nb, Cp, S), lambda g: (g, 0, 0)),
            pl.BlockSpec((2 * Cp, 9 * Cp), lambda g: (0, 0)),
            pl.BlockSpec((2 * Cp, 9 * Cp), lambda g: (0, 0)),
            pl.BlockSpec((Cop, 2 * Cp), lambda g: (0, 0)),
            pl.BlockSpec((Cp, Nb * S), lambda g: (0, 0)),
            pl.BlockSpec((Cp, Nb * S), lambda g: (0, 0)),
        ],
        out_specs=pl.BlockSpec((Nb, Cop, S), lambda g: (g, 0, 0)),
        scratch_shapes=[
            # flat-padded images (per-image halos of width W+1 on each side)
            pltpu.VMEM((Cp, Nb * (S + 2 * (W + 1))), jnp.float32),
        ],
        # For production H*W, tile S into row bands and set vmem_limit_bytes
        # here (v7x VMEM budget is 64 MiB); not needed at these shapes.
        compiler_params=pltpu.CompilerParams(
            dimension_semantics=("parallel",)),
    )(x2d, wa, wb, w1m, mask_l, mask_r)
    return out[:, :C_out].reshape(N, C_out, H, W)


def _reference(x, w3, wd3, w33, wd33, w1):
    # pure-JAX NCHW reference (XLA convolutions)
    dn = ('NCHW', 'OIHW', 'NCHW')

    def conv(t, w, pad=1):
        return lax.conv_general_dilated(t, w, (1, 1), ((pad, pad), (pad, pad)),
                                        dimension_numbers=dn)

    def dwconv(t, w):
        return lax.conv_general_dilated(t, w, (1, 1), ((1, 1), (1, 1)),
                                        dimension_numbers=dn,
                                        feature_group_count=t.shape[1])

    gelu = lambda t: 0.5 * t * (1.0 + lax.erf(t * np.float32(1.0 / np.sqrt(2.0))))
    sig = lambda t: 1.0 / (1.0 + jnp.exp(-t))

    x1 = gelu(conv(x, w3))
    x2 = sig(dwconv(x, wd3)) + x
    xm = x1 * x2
    x3 = sig(dwconv(xm, wd33)) + xm
    x33 = gelu(conv(xm, w33))
    return conv(jnp.concatenate([x3, x33], axis=1), w1, pad=0)


if __name__ == "__main__":
    N, C, H, W, C_out = 2, 4, 16, 16, 8

    key = jax.random.PRNGKey(0)
    k = jax.random.split(key, 6)

    def uinit(kk, shape, fan_in):
        bound = 1.0 / np.sqrt(fan_in)
        return jax.random.uniform(kk, shape, jnp.float32, -bound, bound)

    # PyTorch-layout weights (all bias=False)
    w3 = uinit(k[0], (C, C, 3, 3), 9 * C)          # conv3   OIHW
    wd3 = uinit(k[1], (C, 1, 3, 3), 9)             # convd3  depthwise
    w33 = uinit(k[2], (C, C, 3, 3), 9 * C)         # conv33
    wd33 = uinit(k[3], (C, 1, 3, 3), 9)            # convd33 depthwise
    w1 = uinit(k[4], (C_out, 2 * C, 1, 1), 2 * C)  # conv1 1x1
    x = jax.random.normal(k[5], (N, C, H, W), jnp.float32)

    out = jax.jit(stage_denoiser)(x, w3, wd3, w33, wd33, w1)
    out = jax.block_until_ready(out)

    ref = _reference(x, w3, wd3, w33, wd33, w1)
    np.testing.assert_allclose(np.asarray(out), np.asarray(ref), atol=1e-3, rtol=1e-3)
    print("KERNEL_OK")
</pallas_src>

<mosaic_0001>
module attributes {stable_mosaic.version = 11 : i64} {
  func.func @_stage_denoiser_kernel(%arg0: i32, %arg1: memref<1x8x256xf32, #tpu.memory_space<vmem>>, %arg2: memref<16x72xf32, #tpu.memory_space<vmem>>, %arg3: memref<16x72xf32, #tpu.memory_space<vmem>>, %arg4: memref<8x16xf32, #tpu.memory_space<vmem>>, %arg5: memref<8x256xf32, #tpu.memory_space<vmem>>, %arg6: memref<8x256xf32, #tpu.memory_space<vmem>>, %arg7: memref<1x8x256xf32, #tpu.memory_space<vmem>>, %arg8: memref<8x290xf32, #tpu.memory_space<vmem>>) attributes {dimension_semantics = [#tpu.dimension_semantics<parallel>], iteration_bounds = array<i64: 2>, scalar_prefetch = 0 : i64, scratch_operands = 1 : i64, tpu.core_type = #tpu.core_type<tc>, window_params = [{transform_indices = @transform_0, window_bounds = array<i64: 1, 8, 256>}, {pipeline_mode = #tpu.pipeline_mode<synchronous>, transform_indices = @transform_1, window_bounds = array<i64: 16, 72>}, {pipeline_mode = #tpu.pipeline_mode<synchronous>, transform_indices = @transform_2, window_bounds = array<i64: 16, 72>}, {pipeline_mode = #tpu.pipeline_mode<synchronous>, transform_indices = @transform_3, window_bounds = array<i64: 8, 16>}, {pipeline_mode = #tpu.pipeline_mode<synchronous>, transform_indices = @transform_4, window_bounds = array<i64: 8, 256>}, {pipeline_mode = #tpu.pipeline_mode<synchronous>, transform_indices = @transform_5, window_bounds = array<i64: 8, 256>}, {transform_indices = @transform_6, window_bounds = array<i64: 1, 8, 256>}]} {
    %cst = arith.constant 0.000000e+00 : f32
    %0 = vector.broadcast %cst : f32 to vector<8x290xf32>
    %c0 = arith.constant 0 : index
    %c0_0 = arith.constant 0 : index
    %1 = vector.load %arg8[%c0, %c0_0] : memref<8x290xf32, #tpu.memory_space<vmem>>, vector<8x290xf32>
    tpu.vector_store %arg8[%c0, %c0_0], %0 {strides = array<i32>} : memref<8x290xf32, #tpu.memory_space<vmem>>, vector<8x290xf32>,
    %c0_1 = arith.constant 0 : index
    %c0_2 = arith.constant 0 : index
    %2 = vector.load %arg5[%c0_1, %c0_2] : memref<8x256xf32, #tpu.memory_space<vmem>>, vector<8x256xf32>
    %c0_3 = arith.constant 0 : index
    %c0_4 = arith.constant 0 : index
    %3 = vector.load %arg6[%c0_3, %c0_4] : memref<8x256xf32, #tpu.memory_space<vmem>>, vector<8x256xf32>
    %c0_5 = arith.constant 0 : index
    %c0_6 = arith.constant 0 : index
    %c0_7 = arith.constant 0 : index
    %4 = vector.load %arg1[%c0_5, %c0_6, %c0_7] : memref<1x8x256xf32, #tpu.memory_space<vmem>>, vector<1x8x256xf32>
    %5 = vector.shape_cast %4 : vector<1x8x256xf32> to vector<8x256xf32>
    %c0_8 = arith.constant 0 : index
    %c0_9 = arith.constant 0 : index
    %6 = vector.load %arg2[%c0_8, %c0_9] : memref<16x72xf32, #tpu.memory_space<vmem>>, vector<16x72xf32>
    %c0_10 = arith.constant 0 : index
    %c17 = arith.constant 17 : index
    %7 = vector.load %arg8[%c0_10, %c17] : memref<8x290xf32, #tpu.memory_space<vmem>>, vector<8x256xf32>
    tpu.vector_store %arg8[%c0_10, %c17], %5 {strides = array<i32>} : memref<8x290xf32, #tpu.memory_space<vmem>>, vector<8x256xf32>,
    %c0_11 = arith.constant 0 : index
    %c0_12 = arith.constant 0 : index
    %8 = vector.load %arg8[%c0_11, %c0_12] : memref<8x290xf32, #tpu.memory_space<vmem>>, vector<8x256xf32>
    %9 = arith.mulf %8, %2 : vector<8x256xf32>
    %c0_13 = arith.constant 0 : index
    %c1 = arith.constant 1 : index
    %10 = vector.load %arg8[%c0_13, %c1] : memref<8x290xf32, #tpu.memory_space<vmem>>, vector<8x256xf32>
    %c0_14 = arith.constant 0 : index
    %c2 = arith.constant 2 : index
    %11 = vector.load %arg8[%c0_14, %c2] : memref<8x290xf32, #tpu.memory_space<vmem>>, vector<8x256xf32>
    %12 = arith.mulf %11, %3 : vector<8x256xf32>
    %c0_15 = arith.constant 0 : index
    %c16 = arith.constant 16 : index
    %13 = vector.load %arg8[%c0_15, %c16] : memref<8x290xf32, #tpu.memory_space<vmem>>, vector<8x256xf32>
    %14 = arith.mulf %13, %2 : vector<8x256xf32>
    %c0_16 = arith.constant 0 : index
    %c17_17 = arith.constant 17 : index
    %15 = vector.load %arg8[%c0_16, %c17_17] : memref<8x290xf32, #tpu.memory_space<vmem>>, vector<8x256xf32>
    %c0_18 = arith.constant 0 : index
    %c18 = arith.constant 18 : index
    %16 = vector.load %arg8[%c0_18, %c18] : memref<8x290xf32, #tpu.memory_space<vmem>>, vector<8x256xf32>
    %17 = arith.mulf %16, %3 : vector<8x256xf32>
    %c0_19 = arith.constant 0 : index
    %c32 = arith.constant 32 : index
    %18 = vector.load %arg8[%c0_19, %c32] : memref<8x290xf32, #tpu.memory_space<vmem>>, vector<8x256xf32>
    %19 = arith.mulf %18, %2 : vector<8x256xf32>
    %c0_20 = arith.constant 0 : index
    %c33 = arith.constant 33 : index
    %20 = vector.load %arg8[%c0_20, %c33] : memref<8x290xf32, #tpu.memory_space<vmem>>, vector<8x256xf32>
    %c0_21 = arith.constant 0 : index
    %c34 = arith.constant 34 : index
    %21 = vector.load %arg8[%c0_21, %c34] : memref<8x290xf32, #tpu.memory_space<vmem>>, vector<8x256xf32>
    %22 = arith.mulf %21, %3 : vector<8x256xf32>
    %23 = tpu.concatenate %9, %10, %12, %14, %15, %17, %19, %20, %22 in 0 : vector<8x256xf32>, vector<8x256xf32>, vector<8x256xf32>, vector<8x256xf32>, vector<8x256xf32>, vector<8x256xf32>, vector<8x256xf32>, vector<8x256xf32>, vector<8x256xf32> -> vector<72x256xf32>
    %cst_22 = arith.constant dense<0.000000e+00> : vector<16x256xf32>
    %24 = tpu.matmul %6, %23, %cst_22 {dimension_numbers = #tpu.dot_dimension_numbers<[1], [0], [0], [1], [0, 0, 1, 1], [], []>} : vector<16x72xf32>, vector<72x256xf32>, vector<16x256xf32> -> vector<16x256xf32>
    %25 = vector.extract_strided_slice %24 {offsets = [0, 0], sizes = [8, 256], strides = [1, 1]} : vector<16x256xf32> to vector<8x256xf32>
    %cst_23 = arith.constant 5.000000e-01 : f32
    %26 = vector.broadcast %cst_23 : f32 to vector<8x256xf32>
    %27 = arith.mulf %26, %25 : vector<8x256xf32>
    %cst_24 = arith.constant 0.707106769 : f32
    %28 = vector.broadcast %cst_24 : f32 to vector<8x256xf32>
    %29 = arith.mulf %25, %28 : vector<8x256xf32>
    %cst_25 = arith.constant 0.000000e+00 : f32
    %30 = vector.broadcast %cst_25 : f32 to vector<8x256xf32>
    %31 = arith.cmpf olt, %29, %30 : vector<8x256xf32>
    %cst_26 = arith.constant -1.000000e+00 : f32
    %cst_27 = arith.constant 1.000000e+00 : f32
    %32 = vector.broadcast %cst_26 : f32 to vector<8x256xf32>
    %33 = vector.broadcast %cst_27 : f32 to vector<8x256xf32>
    %34 = arith.select %31, %32, %33 : vector<8x256xi1>, vector<8x256xf32>
    %35 = math.absf %29 : vector<8x256xf32>
    %cst_28 = arith.constant 0.327591091 : f32
    %36 = vector.broadcast %cst_28 : f32 to vector<8x256xf32>
    %37 = arith.mulf %36, %35 : vector<8x256xf32>
    %cst_29 = arith.constant 1.000000e+00 : f32
    %38 = vector.broadcast %cst_29 : f32 to vector<8x256xf32>
    %39 = arith.addf %38, %37 : vector<8x256xf32>
    %cst_30 = arith.constant 1.000000e+00 : f32
    %40 = vector.broadcast %cst_30 : f32 to vector<8x256xf32>
    %41 = arith.divf %40, %39 : vector<8x256xf32>
    %cst_31 = arith.constant 1.06140542 : f32
    %42 = vector.broadcast %cst_31 : f32 to vector<8x256xf32>
    %43 = arith.mulf %42, %41 : vector<8x256xf32>
    %cst_32 = arith.constant -1.45315206 : f32
    %44 = vector.broadcast %cst_32 : f32 to vector<8x256xf32>
    %45 = arith.addf %43, %44 : vector<8x256xf32>
    %46 = arith.mulf %45, %41 : vector<8x256xf32>
    %cst_33 = arith.constant 1.42141378 : f32
    %47 = vector.broadcast %cst_33 : f32 to vector<8x256xf32>
    %48 = arith.addf %46, %47 : vector<8x256xf32>
    %49 = arith.mulf %48, %41 : vector<8x256xf32>
    %cst_34 = arith.constant -0.284496725 : f32
    %50 = vector.broadcast %cst_34 : f32 to vector<8x256xf32>
    %51 = arith.addf %49, %50 : vector<8x256xf32>
    %52 = arith.mulf %51, %41 : vector<8x256xf32>
    %cst_35 = arith.constant 0.254829586 : f32
    %53 = vector.broadcast %cst_35 : f32 to vector<8x256xf32>
    %54 = arith.addf %52, %53 : vector<8x256xf32>
    %55 = arith.mulf %54, %41 : vector<8x256xf32>
    %cst_36 = arith.constant 0.000000e+00 : f32
    %56 = vector.broadcast %cst_36 : f32 to vector<8x256xf32>
    %57 = arith.subf %56, %35 : vector<8x256xf32>
    %58 = arith.mulf %57, %35 : vector<8x256xf32>
    %59 = math.exp %58 : vector<8x256xf32>
    %60 = arith.mulf %55, %59 : vector<8x256xf32>
    %cst_37 = arith.constant 1.000000e+00 : f32
    %61 = vector.broadcast %cst_37 : f32 to vector<8x256xf32>
    %62 = arith.subf %61, %60 : vector<8x256xf32>
    %63 = arith.mulf %34, %62 : vector<8x256xf32>
    %cst_38 = arith.constant 1.000000e+00 : f32
    %64 = vector.broadcast %cst_38 : f32 to vector<8x256xf32>
    %65 = arith.addf %64, %63 : vector<8x256xf32>
    %66 = arith.mulf %27, %65 : vector<8x256xf32>
    %67 = vector.extract_strided_slice %24 {offsets = [8, 0], sizes = [8, 256], strides = [1, 1]} : vector<16x256xf32> to vector<8x256xf32>
    %cst_39 = arith.constant 0.000000e+00 : f32
    %68 = vector.broadcast %cst_39 : f32 to vector<8x256xf32>
    %69 = arith.subf %68, %67 : vector<8x256xf32>
    %70 = math.exp %69 : vector<8x256xf32>
    %cst_40 = arith.constant 1.000000e+00 : f32
    %71 = vector.broadcast %cst_40 : f32 to vector<8x256xf32>
    %72 = arith.addf %71, %70 : vector<8x256xf32>
    %cst_41 = arith.constant 1.000000e+00 : f32
    %73 = vector.broadcast %cst_41 : f32 to vector<8x256xf32>
    %74 = arith.divf %73, %72 : vector<8x256xf32>
    %75 = arith.addf %74, %5 : vector<8x256xf32>
    %76 = arith.mulf %66, %75 : vector<8x256xf32>
    %c0_42 = arith.constant 0 : index
    %c0_43 = arith.constant 0 : index
    %77 = vector.load %arg3[%c0_42, %c0_43] : memref<16x72xf32, #tpu.memory_space<vmem>>, vector<16x72xf32>
    %c0_44 = arith.constant 0 : index
    %c17_45 = arith.constant 17 : index
    %78 = vector.load %arg8[%c0_44, %c17_45] : memref<8x290xf32, #tpu.memory_space<vmem>>, vector<8x256xf32>
    tpu.vector_store %arg8[%c0_44, %c17_45], %76 {strides = array<i32>} : memref<8x290xf32, #tpu.memory_space<vmem>>, vector<8x256xf32>,
    %c0_46 = arith.constant 0 : index
    %c0_47 = arith.constant 0 : index
    %79 = vector.load %arg8[%c0_46, %c0_47] : memref<8x290xf32, #tpu.memory_space<vmem>>, vector<8x256xf32>
    %80 = arith.mulf %79, %2 : vector<8x256xf32>
    %c0_48 = arith.constant 0 : index
    %c1_49 = arith.constant 1 : index
    %81 = vector.load %arg8[%c0_48, %c1_49] : memref<8x290xf32, #tpu.memory_space<vmem>>, vector<8x256xf32>
    %c0_50 = arith.constant 0 : index
    %c2_51 = arith.constant 2 : index
    %82 = vector.load %arg8[%c0_50, %c2_51] : memref<8x290xf32, #tpu.memory_space<vmem>>, vector<8x256xf32>
    %83 = arith.mulf %82, %3 : vector<8x256xf32>
    %c0_52 = arith.constant 0 : index
    %c16_53 = arith.constant 16 : index
    %84 = vector.load %arg8[%c0_52, %c16_53] : memref<8x290xf32, #tpu.memory_space<vmem>>, vector<8x256xf32>
    %85 = arith.mulf %84, %2 : vector<8x256xf32>
    %c0_54 = arith.constant 0 : index
    %c17_55 = arith.constant 17 : index
    %86 = vector.load %arg8[%c0_54, %c17_55] : memref<8x290xf32, #tpu.memory_space<vmem>>, vector<8x256xf32>
    %c0_56 = arith.constant 0 : index
    %c18_57 = arith.constant 18 : index
    %87 = vector.load %arg8[%c0_56, %c18_57] : memref<8x290xf32, #tpu.memory_space<vmem>>, vector<8x256xf32>
    %88 = arith.mulf %87, %3 : vector<8x256xf32>
    %c0_58 = arith.constant 0 : index
    %c32_59 = arith.constant 32 : index
    %89 = vector.load %arg8[%c0_58, %c32_59] : memref<8x290xf32, #tpu.memory_space<vmem>>, vector<8x256xf32>
    %90 = arith.mulf %89, %2 : vector<8x256xf32>
    %c0_60 = arith.constant 0 : index
    %c33_61 = arith.constant 33 : index
    %91 = vector.load %arg8[%c0_60, %c33_61] : memref<8x290xf32, #tpu.memory_space<vmem>>, vector<8x256xf32>
    %c0_62 = arith.constant 0 : index
    %c34_63 = arith.constant 34 : index
    %92 = vector.load %arg8[%c0_62, %c34_63] : memref<8x290xf32, #tpu.memory_space<vmem>>, vector<8x256xf32>
    %93 = arith.mulf %92, %3 : vector<8x256xf32>
    %94 = tpu.concatenate %80, %81, %83, %85, %86, %88, %90, %91, %93 in 0 : vector<8x256xf32>, vector<8x256xf32>, vector<8x256xf32>, vector<8x256xf32>, vector<8x256xf32>, vector<8x256xf32>, vector<8x256xf32>, vector<8x256xf32>, vector<8x256xf32> -> vector<72x256xf32>
    %cst_64 = arith.constant dense<0.000000e+00> : vector<16x256xf32>
    %95 = tpu.matmul %77, %94, %cst_64 {dimension_numbers = #tpu.dot_dimension_numbers<[1], [0], [0], [1], [0, 0, 1, 1], [], []>} : vector<16x72xf32>, vector<72x256xf32>, vector<16x256xf32> -> vector<16x256xf32>
    %96 = vector.extract_strided_slice %95 {offsets = [0, 0], sizes = [8, 256], strides = [1, 1]} : vector<16x256xf32> to vector<8x256xf32>
    %cst_65 = arith.constant 0.000000e+00 : f32
    %97 = vector.broadcast %cst_65 : f32 to vector<8x256xf32>
    %98 = arith.subf %97, %96 : vector<8x256xf32>
    %99 = math.exp %98 : vector<8x256xf32>
    %cst_66 = arith.constant 1.000000e+00 : f32
    %100 = vector.broadcast %cst_66 : f32 to vector<8x256xf32>
    %101 = arith.addf %100, %99 : vector<8x256xf32>
    %cst_67 = arith.constant 1.000000e+00 : f32
    %102 = vector.broadcast %cst_67 : f32 to vector<8x256xf32>
    %103 = arith.divf %102, %101 : vector<8x256xf32>
    %104 = arith.addf %103, %76 : vector<8x256xf32>
    %105 = vector.extract_strided_slice %95 {offsets = [8, 0], sizes = [8, 256], strides = [1, 1]} : vector<16x256xf32> to vector<8x256xf32>
    %cst_68 = arith.constant 5.000000e-01 : f32
    %106 = vector.broadcast %cst_68 : f32 to vector<8x256xf32>
    %107 = arith.mulf %106, %105 : vector<8x256xf32>
    %cst_69 = arith.constant 0.707106769 : f32
    %108 = vector.broadcast %cst_69 : f32 to vector<8x256xf32>
    %109 = arith.mulf %105, %108 : vector<8x256xf32>
    %cst_70 = arith.constant 0.000000e+00 : f32
    %110 = vector.broadcast %cst_70 : f32 to vector<8x256xf32>
    %111 = arith.cmpf olt, %109, %110 : vector<8x256xf32>
    %cst_71 = arith.constant -1.000000e+00 : f32
    %cst_72 = arith.constant 1.000000e+00 : f32
    %112 = vector.broadcast %cst_71 : f32 to vector<8x256xf32>
    %113 = vector.broadcast %cst_72 : f32 to vector<8x256xf32>
    %114 = arith.select %111, %112, %113 : vector<8x256xi1>, vector<8x256xf32>
    %115 = math.absf %109 : vector<8x256xf32>
    %cst_73 = arith.constant 0.327591091 : f32
    %116 = vector.broadcast %cst_73 : f32 to vector<8x256xf32>
    %117 = arith.mulf %116, %115 : vector<8x256xf32>
    %cst_74 = arith.constant 1.000000e+00 : f32
    %118 = vector.broadcast %cst_74 : f32 to vector<8x256xf32>
    %119 = arith.addf %118, %117 : vector<8x256xf32>
    %cst_75 = arith.constant 1.000000e+00 : f32
    %120 = vector.broadcast %cst_75 : f32 to vector<8x256xf32>
    %121 = arith.divf %120, %119 : vector<8x256xf32>
    %cst_76 = arith.constant 1.06140542 : f32
    %122 = vector.broadcast %cst_76 : f32 to vector<8x256xf32>
    %123 = arith.mulf %122, %121 : vector<8x256xf32>
    %cst_77 = arith.constant -1.45315206 : f32
    %124 = vector.broadcast %cst_77 : f32 to vector<8x256xf32>
    %125 = arith.addf %123, %124 : vector<8x256xf32>
    %126 = arith.mulf %125, %121 : vector<8x256xf32>
    %cst_78 = arith.constant 1.42141378 : f32
    %127 = vector.broadcast %cst_78 : f32 to vector<8x256xf32>
    %128 = arith.addf %126, %127 : vector<8x256xf32>
    %129 = arith.mulf %128, %121 : vector<8x256xf32>
    %cst_79 = arith.constant -0.284496725 : f32
    %130 = vector.broadcast %cst_79 : f32 to vector<8x256xf32>
    %131 = arith.addf %129, %130 : vector<8x256xf32>
    %132 = arith.mulf %131, %121 : vector<8x256xf32>
    %cst_80 = arith.constant 0.254829586 : f32
    %133 = vector.broadcast %cst_80 : f32 to vector<8x256xf32>
    %134 = arith.addf %132, %133 : vector<8x256xf32>
    %135 = arith.mulf %134, %121 : vector<8x256xf32>
    %cst_81 = arith.constant 0.000000e+00 : f32
    %136 = vector.broadcast %cst_81 : f32 to vector<8x256xf32>
    %137 = arith.subf %136, %115 : vector<8x256xf32>
    %138 = arith.mulf %137, %115 : vector<8x256xf32>
    %139 = math.exp %138 : vector<8x256xf32>
    %140 = arith.mulf %135, %139 : vector<8x256xf32>
    %cst_82 = arith.constant 1.000000e+00 : f32
    %141 = vector.broadcast %cst_82 : f32 to vector<8x256xf32>
    %142 = arith.subf %141, %140 : vector<8x256xf32>
    %143 = arith.mulf %114, %142 : vector<8x256xf32>
    %cst_83 = arith.constant 1.000000e+00 : f32
    %144 = vector.broadcast %cst_83 : f32 to vector<8x256xf32>
    %145 = arith.addf %144, %143 : vector<8x256xf32>
    %146 = arith.mulf %107, %145 : vector<8x256xf32>
    %c0_84 = arith.constant 0 : index
    %c0_85 = arith.constant 0 : index
    %147 = vector.load %arg4[%c0_84, %c0_85] : memref<8x16xf32, #tpu.memory_space<vmem>>, vector<8x16xf32>
    %148 = tpu.concatenate %104, %146 in 0 : vector<8x256xf32>, vector<8x256xf32> -> vector<16x256xf32>
    %cst_86 = arith.constant dense<0.000000e+00> : vector<8x256xf32>
    %149 = tpu.matmul %147, %148, %cst_86 {dimension_numbers = #tpu.dot_dimension_numbers<[1], [0], [0], [1], [0, 0, 1, 1], [], []>} : vector<8x16xf32>, vector<16x256xf32>, vector<8x256xf32> -> vector<8x256xf32>
    %c0_87 = arith.constant 0 : index
    %c0_88 = arith.constant 0 : index
    %c0_89 = arith.constant 0 : index
    %150 = vector.load %arg7[%c0_87, %c0_88, %c0_89] : memref<1x8x256xf32, #tpu.memory_space<vmem>>, vector<1x8x256xf32>
    %151 = vector.shape_cast %150 : vector<1x8x256xf32> to vector<8x256xf32>
    %152 = vector.shape_cast %149 : vector<8x256xf32> to vector<1x8x256xf32>
    tpu.vector_store %arg7[%c0_87, %c0_88, %c0_89], %152 {strides = array<i32>} : memref<1x8x256xf32, #tpu.memory_space<vmem>>, vector<1x8x256xf32>,
    return
  }
  func.func @transform_0(%arg0: i32) -> (i32, i32, i32) {
    %c0_i32 = arith.constant 0 : i32
    %c0_i32_0 = arith.constant 0 : i32
    %c0_i32_1 = arith.constant 0 : i32
    return %arg0, %c0_i32, %c0_i32_0 : i32, i32, i32
  }
  func.func @transform_1(%arg0: i32) -> (i32, i32) {
    %c0_i32 = arith.constant 0 : i32
    %c0_i32_0 = arith.constant 0 : i32
    %c0_i32_1 = arith.constant 0 : i32
    return %c0_i32, %c0_i32_0 : i32, i32
  }
  func.func @transform_2(%arg0: i32) -> (i32, i32) {
    %c0_i32 = arith.constant 0 : i32
    %c0_i32_0 = arith.constant 0 : i32
    %c0_i32_1 = arith.constant 0 : i32
    return %c0_i32, %c0_i32_0 : i32, i32
  }
  func.func @transform_3(%arg0: i32) -> (i32, i32) {
    %c0_i32 = arith.constant 0 : i32
    %c0_i32_0 = arith.constant 0 : i32
    %c0_i32_1 = arith.constant 0 : i32
    return %c0_i32, %c0_i32_0 : i32, i32
  }
  func.func @transform_4(%arg0: i32) -> (i32, i32) {
    %c0_i32 = arith.constant 0 : i32
    %c0_i32_0 = arith.constant 0 : i32
    %c0_i32_1 = arith.constant 0 : i32
    return %c0_i32, %c0_i32_0 : i32, i32
  }
  func.func @transform_5(%arg0: i32) -> (i32, i32) {
    %c0_i32 = arith.constant 0 : i32
    %c0_i32_0 = arith.constant 0 : i32
    %c0_i32_1 = arith.constant 0 : i32
    return %c0_i32, %c0_i32_0 : i32, i32
  }
  func.func @transform_6(%arg0: i32) -> (i32, i32, i32) {
    %c0_i32 = arith.constant 0 : i32
    %c0_i32_0 = arith.constant 0 : i32
    %c0_i32_1 = arith.constant 0 : i32
    return %arg0, %c0_i32, %c0_i32_0 : i32, i32, i32
  }
}

</mosaic_0001>

<llo_original>
// kernel: stage_denoiser.1
$region0: #{stage_denoiser.1}
  #allocation0 [shape = 'u32[]', space=smem, size = 0x4, offset = 0x4, fixed_abs, tag = 'smem constant byte address 0x4 - core index']
  #allocation1 [shape = 'u32[72,128]{1,0:T(1,128)}', space=vmem, size = 0x9000, scoped, tag = 'internal scratch']
  #allocation2 [shape = 'f32[8,290]{1,0:T(8,128)}', space=vmem, size = 0x3000, scoped, tag = 'scratch operand']
  %s0 = inlined_call_operand.vmem [shape: f32[2,8,256], index: 0, kind: input, shape index: {}]
  %s1 = inlined_call_operand.vmem [shape: f32[16,72], index: 1, kind: input, shape index: {}]
  %s2 = inlined_call_operand.vmem [shape: f32[16,72], index: 2, kind: input, shape index: {}]
  %s3 = inlined_call_operand.vmem [shape: f32[8,16], index: 3, kind: input, shape index: {}]
  %s4 = inlined_call_operand.vmem [shape: f32[8,256], index: 4, kind: input, shape index: {}]
  %s5 = inlined_call_operand.vmem [shape: f32[8,256], index: 5, kind: input, shape index: {}]
  %s6 = inlined_call_operand.vmem [shape: f32[2,8,256], index: 6, kind: output, shape index: {}]
  %s7 = sld [smem:[#allocation0]]
  $region57: #{stage_denoiser.1} parent=0
    _
  %s9 = ssub.s32 1, %s7
  %s10 = scalar_select 0, %s9, %s7
  loop: start=0, step=1, limit=4
  $region2: #{stage_denoiser.1} parent=0 // loop_pre_header
    _
  $region3: #{stage_denoiser.1} parent=0 // loop_header
    %s12 = sphi 0, %s16
    %p13 = scmp.ge.s32.totalorder %s12, 4
    %s22 = sphi 0, %s24
    %s25 = sphi 0, %s22
    %s26 = sphi 0, %s25
    %s42 = sphi 0, %s26
    %s46 = sphi 0, %s46
    %s48 = sphi 0, %s46
    %s49 = sphi 0, %s48
    %s63 = sphi 0, %s49
    %s67 = sphi 0, %s67
    %s69 = sphi 0, %s67
    %s70 = sphi 0, %s69
    %s84 = sphi 0, %s70
    %s88 = sphi 0, %s88
    %s90 = sphi 0, %s88
    %s91 = sphi 0, %s90
    %s105 = sphi 0, %s91
    %s109 = sphi 0, %s109
    %s111 = sphi 0, %s109
    %s112 = sphi 0, %s111
    %s126 = sphi 0, %s112
    %s130 = sphi 0, %s130
    %s132 = sphi 0, %s130
    %s133 = sphi 0, %s132
    %s147 = sphi 0, %s133
    %s153 = sphi 0, %s155
    %s156 = sphi 0, %s153
    %s157 = sphi 0, %s156
    %s173 = sphi 0, %s157
  $region4: #{stage_denoiser.1} parent=0 // loop_header_branch
    %15 = sbr.rel (%p13) target = $region8
  $region5: #{stage_denoiser.1} parent=0 // loop_body
    %s17 = ssub.s32 %s12, 1
    %s18 = ssub.s32 %s12, 2
    %s19 = sadd.s32 %s12, 1
    %s20 = ssub.s32 %s12, %s19
    %p21 = scmp.eq.s32.totalorder %s20, 0
    %s23 = sadd.s32 %s22, 1
    %s24 = scalar_select %p21, %s22, %s23
    %p27 = pneg %p21
    %p28 = scmp.eq.s32.totalorder %s12, 1
    %p29 = por %p27, %p28
    %p30 = scmp.ne.s32.totalorder %s22, %s25
    %p31 = scmp.eq.s32.totalorder %s12, 0
    %p32 = por %p30, %p31
    %p33 = scmp.ne.s32.totalorder %s22, %s25
    %p34 = scmp.eq.s32.totalorder %s17, 1
    %p35 = por %p33, %p34
    %p36 = scmp.ne.s32.totalorder %s25, %s26
    %p37 = scmp.eq.s32.totalorder %s17, 0
    %p38 = por %p36, %p37
    %p39 = scmp.ne.s32.totalorder %s25, %s26
    %p40 = scmp.eq.s32.totalorder %s18, 1
    %p41 = por %p39, %p40
    %p43 = scmp.ne.s32.totalorder %s26, %s42
    %p44 = scmp.eq.s32.totalorder %s18, 0
    %p45 = por %p43, %p44
    %s47 = sadd.s32 %s46, 1
    %p50 = scmp.eq.s32.totalorder %s12, 1
    %p51 = scmp.ne.s32.totalorder %s46, %s48
    %p52 = scmp.eq.s32.totalorder %s12, 0
    %p53 = por %p51, %p52
    %p54 = scmp.ne.s32.totalorder %s46, %s48
    %p55 = scmp.eq.s32.totalorder %s17, 1
    %p56 = por %p54, %p55
    %p57 = scmp.ne.s32.totalorder %s48, %s49
    %p58 = scmp.eq.s32.totalorder %s17, 0
    %p59 = por %p57, %p58
    %p60 = scmp.ne.s32.totalorder %s48, %s49
    %p61 = scmp.eq.s32.totalorder %s18, 1
    %p62 = por %p60, %p61
    %p64 = scmp.ne.s32.totalorder %s49, %s63
    %p65 = scmp.eq.s32.totalorder %s18, 0
    %p66 = por %p64, %p65
    %s68 = sadd.s32 %s67, 1
    %p71 = scmp.eq.s32.totalorder %s12, 1
    %p72 = scmp.ne.s32.totalorder %s67, %s69
    %p73 = scmp.eq.s32.totalorder %s12, 0
    %p74 = por %p72, %p73
    %p75 = scmp.ne.s32.totalorder %s67, %s69
    %p76 = scmp.eq.s32.totalorder %s17, 1
    %p77 = por %p75, %p76
    %p78 = scmp.ne.s32.totalorder %s69, %s70
    %p79 = scmp.eq.s32.totalorder %s17, 0
    %p80 = por %p78, %p79
    %p81 = scmp.ne.s32.totalorder %s69, %s70
    %p82 = scmp.eq.s32.totalorder %s18, 1
    %p83 = por %p81, %p82
    %p85 = scmp.ne.s32.totalorder %s70, %s84
    %p86 = scmp.eq.s32.totalorder %s18, 0
    %p87 = por %p85, %p86
    %s89 = sadd.s32 %s88, 1
    %p92 = scmp.eq.s32.totalorder %s12, 1
    %p93 = scmp.ne.s32.totalorder %s88, %s90
    %p94 = scmp.eq.s32.totalorder %s12, 0
    %p95 = por %p93, %p94
    %p96 = scmp.ne.s32.totalorder %s88, %s90
    %p97 = scmp.eq.s32.totalorder %s17, 1
    %p98 = por %p96, %p97
    %p99 = scmp.ne.s32.totalorder %s90, %s91
    %p100 = scmp.eq.s32.totalorder %s17, 0
    %p101 = por %p99, %p100
    %p102 = scmp.ne.s32.totalorder %s90, %s91
    %p103 = scmp.eq.s32.totalorder %s18, 1
    %p104 = por %p102, %p103
    %p106 = scmp.ne.s32.totalorder %s91, %s105
    %p107 = scmp.eq.s32.totalorder %s18, 0
    %p108 = por %p106, %p107
    %s110 = sadd.s32 %s109, 1
    %p113 = scmp.eq.s32.totalorder %s12, 1
    %p114 = scmp.ne.s32.totalorder %s109, %s111
    %p115 = scmp.eq.s32.totalorder %s12, 0
    %p116 = por %p114, %p115
    %p117 = scmp.ne.s32.totalorder %s109, %s111
    %p118 = scmp.eq.s32.totalorder %s17, 1
    %p119 = por %p117, %p118
    %p120 = scmp.ne.s32.totalorder %s111, %s112
    %p121 = scmp.eq.s32.totalorder %s17, 0
    %p122 = por %p120, %p121
    %p123 = scmp.ne.s32.totalorder %s111, %s112
    %p124 = scmp.eq.s32.totalorder %s18, 1
    %p125 = por %p123, %p124
    %p127 = scmp.ne.s32.totalorder %s112, %s126
    %p128 = scmp.eq.s32.totalorder %s18, 0
    %p129 = por %p127, %p128
    %s131 = sadd.s32 %s130, 1
    %p134 = scmp.eq.s32.totalorder %s12, 1
    %p135 = scmp.ne.s32.totalorder %s130, %s132
    %p136 = scmp.eq.s32.totalorder %s12, 0
    %p137 = por %p135, %p136
    %p138 = scmp.ne.s32.totalorder %s130, %s132
    %p139 = scmp.eq.s32.totalorder %s17, 1
    %p140 = por %p138, %p139
    %p141 = scmp.ne.s32.totalorder %s132, %s133
    %p142 = scmp.eq.s32.totalorder %s17, 0
    %p143 = por %p141, %p142
    %p144 = scmp.ne.s32.totalorder %s132, %s133
    %p145 = scmp.eq.s32.totalorder %s18, 1
    %p146 = por %p144, %p145
    %p148 = scmp.ne.s32.totalorder %s133, %s147
    %p149 = scmp.eq.s32.totalorder %s18, 0
    %p150 = por %p148, %p149
    %s151 = ssub.s32 %s12, %s19
    %p152 = scmp.eq.s32.totalorder %s151, 0
    %s154 = sadd.s32 %s153, 1
    %s155 = scalar_select %p152, %s153, %s154
    %p158 = pneg %p152
    %p159 = scmp.eq.s32.totalorder %s12, 1
    %p160 = por %p158, %p159
    %p161 = scmp.ne.s32.totalorder %s153, %s156
    %p162 = scmp.eq.s32.totalorder %s12, 0
    %p163 = por %p161, %p162
    %p164 = scmp.ne.s32.totalorder %s153, %s156
    %p165 = scmp.eq.s32.totalorder %s17, 1
    %p166 = por %p164, %p165
    %p167 = scmp.ne.s32.totalorder %s156, %s157
    %p168 = scmp.eq.s32.totalorder %s17, 0
    %p169 = por %p167, %p168
    %p170 = scmp.ne.s32.totalorder %s156, %s157
    %p171 = scmp.eq.s32.totalorder %s18, 1
    %p172 = por %p170, %p171
    %p174 = scmp.ne.s32.totalorder %s157, %s173
    %p175 = scmp.eq.s32.totalorder %s18, 0
    %p176 = por %p174, %p175
    %p177 = scmp.le.s32.totalorder 1, %s12
    %p178 = scmp.lt.s32.totalorder %s12, 3
    %p179 = pnand %p177, %p178
    %p180 = pneg %p179
    // Predicated region
    $region9: #{stage_denoiser.1} parent=5 // pred_check
      _
    $region10: #{stage_denoiser.1} parent=5 // pred_check_branch
      %182 = sbr.rel (%p179) target = $region12
    $region11: #{stage_denoiser.1} parent=5 // pred_region
      %s183 = ssub.s32 %s12, 1
      // Predicated region
      $region13: #{stage_denoiser.1} parent=11 // pred_check
        %p184 = pneg %p59
      $region14: #{stage_denoiser.1} parent=11 // pred_check_branch
        %186 = sbr.rel (%p184) target = $region16
      $region15: #{stage_denoiser.1} parent=11 // pred_region
        _
      $region16: #{stage_denoiser.1} parent=11 // pred_fallthru
        _
      // Predicated region
      $region17: #{stage_denoiser.1} parent=11 // pred_check
        %p187 = pneg %p80
      $region18: #{stage_denoiser.1} parent=11 // pred_check_branch
        %189 = sbr.rel (%p187) target = $region20
      $region19: #{stage_denoiser.1} parent=11 // pred_region
        _
      $region20: #{stage_denoiser.1} parent=11 // pred_fallthru
        _
      // Predicated region
      $region21: #{stage_denoiser.1} parent=11 // pred_check
        %p190 = pneg %p101
      $region22: #{stage_denoiser.1} parent=11 // pred_check_branch
        %192 = sbr.rel (%p190) target = $region24
      $region23: #{stage_denoiser.1} parent=11 // pred_region
        _
      $region24: #{stage_denoiser.1} parent=11 // pred_fallthru
        _
      // Predicated region
      $region25: #{stage_denoiser.1} parent=11 // pred_check
        %p193 = pneg %p122
      $region26: #{stage_denoiser.1} parent=11 // pred_check_branch
        %195 = sbr.rel (%p193) target = $region28
      $region27: #{stage_denoiser.1} parent=11 // pred_region
        _
      $region28: #{stage_denoiser.1} parent=11 // pred_fallthru
        _
      // Predicated region
      $region29: #{stage_denoiser.1} parent=11 // pred_check
        %p196 = pneg %p143
      $region30: #{stage_denoiser.1} parent=11 // pred_check_branch
        %198 = sbr.rel (%p196) target = $region32
      $region31: #{stage_denoiser.1} parent=11 // pred_region
        _
      $region32: #{stage_denoiser.1} parent=11 // pred_fallthru
        _
    $region12: #{stage_denoiser.1} parent=5 // pred_fallthru
      _
    %p199 = scmp.lt.s32.totalorder %s12, 2
    // Predicated region
    $region33: #{stage_denoiser.1} parent=5 // pred_check
      %p200 = pneg %p199
    $region34: #{stage_denoiser.1} parent=5 // pred_check_branch
      %202 = sbr.rel (%p200) target = $region36
    $region35: #{stage_denoiser.1} parent=5 // pred_region
      // Predicated region
      $region37: #{stage_denoiser.1} parent=35 // pred_check
        %p203 = pneg %p32
      $region38: #{stage_denoiser.1} parent=35 // pred_check_branch
        %205 = sbr.rel (%p203) target = $region40
      $region39: #{stage_denoiser.1} parent=35 // pred_region
        %p206 = scmp.lt.s32.totalorder %s12, 1
        %s207 = scalar_select %p206, %s12, 1
        %s208 = smul.addr %s207, 2
        %s209 = smul.addr %s208, 8
        %s210 = scalar_lea.vmem %s0, %s209
      $region40: #{stage_denoiser.1} parent=35 // pred_fallthru
        _
    $region36: #{stage_denoiser.1} parent=5 // pred_fallthru
      _
    %p211 = scmp.le.s32.totalorder 1, %s12
    %p212 = scmp.lt.s32.totalorder %s12, 3
    %p213 = pnand %p211, %p212
    %p214 = pneg %p213
    // Predicated region
    $region41: #{stage_denoiser.1} parent=5 // pred_check
      _
    $region42: #{stage_denoiser.1} parent=5 // pred_check_branch
      %216 = sbr.rel (%p213) target = $region44
    $region43: #{stage_denoiser.1} parent=5 // pred_region
      %s217 = ssub.s32 %s12, 1
      %p218 = scmp.lt.s32.totalorder %s17, 1
      %s219 = scalar_select %p218, %s17, 1
      %s220 = smul.addr %s219, 2
      %s221 = smul.addr %s220, 8
      %s222 = scalar_lea.vmem %s0, %s221
      %p223 = pneg %p38
      %p224 = pneg %p35
      %p225 = pneg %p59
      %p226 = pneg %p56
      %p227 = pneg %p80
      %p228 = pneg %p77
      %p229 = pneg %p101
      %p230 = pneg %p98
      %p231 = pneg %p122
      %p232 = pneg %p119
      %p233 = pneg %p143
      %p234 = pneg %p140
      %p235 = pneg %p169
      %p236 = pneg %p166
      %p237 = scmp.lt.s32.totalorder %s17, 1
      %s238 = scalar_select %p237, %s17, 1
      %s239 = smul.addr %s238, 2
      %s240 = smul.addr %s239, 8
      %s241 = scalar_lea.vmem %s6, %s240
      %p242 = scmp.lt.s32.totalorder %s17, 1
      %s243 = scalar_select %p242, %s17, 1
      %s244 = smul.addr %s243, 2
      %s245 = smul.addr %s244, 8
      %s246 = scalar_lea.vmem %s0, %s245
      %p247 = scmp.lt.s32.totalorder %s17, 1
      %s248 = scalar_select %p247, %s17, 1
      %s249 = smul.addr %s248, 2
      %s250 = smul.addr %s249, 8
      %s251 = scalar_lea.vmem %s6, %s250
      %252 = vst [vmem:[#allocation2] sm:$0xff] 0.0
      %253 = vst [vmem:[#allocation2 + $0x8] sm:$0xff] 0.0
      %vm254 = vcmask 277504
      %255 = vst.msk [vmem:[#allocation2 + $0x10] sm:$0xff] %vm254, 0.0
      %v256 = vld [vmem:[%s4] sm:$0xff]
      %v257 = vld [vmem:[%s4 + $0x8] sm:$0xff]
      %v258 = vld [vmem:[%s5] sm:$0xff]
      %v259 = vld [vmem:[%s5 + $0x8] sm:$0xff]
      %v260 = vld [vmem:[%s246] sm:$0xff]
      %v261 = vld [vmem:[%s246 + $0x8] sm:$0xff]
      %v262 = vld [vmem:[%s1] sm:$0xff]
      %v263 = vld [vmem:[%s1 + $0x8] sm:$0xff]
      %266 = vrot.lane.b32.xlu0 %v260, 17
      %v267 = vpop.permute.xlu0 %266
      %268 = vrot.lane.b32.xlu0 %v261, 17
      %v269 = vpop.permute.xlu0 %268
      %vm270 = vcmask 138240
      %v271 = vsel %vm270, %v267, %v269
      %vm275 = vcmask 1047688
      %276 = vst.msk [vmem:[#allocation2] sm:$0xff] %vm275, %v267
      %277 = vst [vmem:[#allocation2 + $0x8] sm:$0xff] %v271
      %278 = vst.msk [vmem:[#allocation2 + $0x10] sm:$0xff] %vm270, %v269
      %v279 = vld [vmem:[#allocation2] sm:$0xff]
      %v280 = vld [vmem:[#allocation2 + $0x8] sm:$0xff]
      %v281 = vmul.f32 %v279, %v256
      %v282 = vmul.f32 %v280, %v257
      %v283 = vld [vmem:[#allocation2 + $0x10] sm:$0xff]
      %286 = vrot.lane.b32.xlu0 %v258, 2
      %v287 = vpop.permute.xlu0 %286
      %288 = vrot.lane.b32.xlu0 %v259, 2
      %v289 = vpop.permute.xlu0 %288
      %vm290 = vcmask 15360
      %v291 = vsel %vm290, %v287, %v289
      %v295 = vmul.f32 %v279, %v287
      %v296 = vmul.f32 %v280, %v291
      %v297 = vmul.f32 %v283, %v289
      %300 = vrot.lane.b32.xlu0 %v256, 16
      %v301 = vpop.permute.xlu0 %300
      %302 = vrot.lane.b32.xlu0 %v257, 16
      %v303 = vpop.permute.xlu0 %302
      %vm304 = vcmask 130048
      %v305 = vsel %vm304, %v301, %v303
      %v309 = vmul.f32 %v279, %v301
      %v310 = vmul.f32 %v280, %v305
      %v311 = vmul.f32 %v283, %v303
      %312 = vrot.lane.b32.xlu0 %v258, 18
      %v313 = vpop.permute.xlu0 %312
      %314 = vrot.lane.b32.xlu0 %v259, 18
      %v315 = vpop.permute.xlu0 %314
      %vm316 = vcmask 146432
      %v317 = vsel %vm316, %v313, %v315
      %v321 = vmul.f32 %v279, %v313
      %v322 = vmul.f32 %v280, %v317
      %v323 = vmul.f32 %v283, %v315
      %324 = vrot.lane.b32.xlu0 %v256, 32
      %v325 = vpop.permute.xlu0 %324
      %326 = vrot.lane.b32.xlu0 %v257, 32
      %v327 = vpop.permute.xlu0 %326
      %vm328 = vcmask 261120
      %v329 = vsel %vm328, %v325, %v327
      %v333 = vmul.f32 %v279, %v325
      %v334 = vmul.f32 %v280, %v329
      %v335 = vmul.f32 %v283, %v327
      %336 = vrot.lane.b32.xlu0 %v258, 34
      %v337 = vpop.permute.xlu0 %336
      %338 = vrot.lane.b32.xlu0 %v259, 34
      %v339 = vpop.permute.xlu0 %338
      %v340 = vsel %vm254, %v337, %v339
      %v344 = vmul.f32 %v279, %v337
      %v345 = vmul.f32 %v280, %v340
      %v346 = vmul.f32 %v283, %v339
      %350 = vrot.lane.b32.xlu0 %v279, 127
      %v351 = vpop.permute.xlu0 %350
      %352 = vrot.lane.b32.xlu0 %v280, 127
      %v353 = vpop.permute.xlu0 %352
      %354 = vrot.lane.b32.xlu0 %v283, 127
      %v355 = vpop.permute.xlu0 %354
      %vm356 = vcmask 1039360
      %v357 = vsel %vm356, %v351, %v353
      %v358 = vsel %vm356, %v353, %v355
      %364 = vrot.lane.b32.xlu0 %v295, 126
      %v365 = vpop.permute.xlu0 %364
      %366 = vrot.lane.b32.xlu0 %v296, 126
      %v367 = vpop.permute.xlu0 %366
      %368 = vrot.lane.b32.xlu0 %v297, 126
      %v369 = vpop.permute.xlu0 %368
      %vm370 = vcmask 1031168
      %v371 = vsel %vm370, %v365, %v367
      %v372 = vsel %vm370, %v367, %v369
      %378 = vrot.lane.b32.xlu0 %v309, 112
      %v379 = vpop.permute.xlu0 %378
      %380 = vrot.lane.b32.xlu0 %v310, 112
      %v381 = vpop.permute.xlu0 %380
      %382 = vrot.lane.b32.xlu0 %v311, 112
      %v383 = vpop.permute.xlu0 %382
      %vm384 = vcmask 916480
      %v385 = vsel %vm384, %v379, %v381
      %v386 = vsel %vm384, %v381, %v383
      %389 = vrot.lane.b32.xlu0 %v279, 111
      %v390 = vpop.permute.xlu0 %389
      %391 = vrot.lane.b32.xlu0 %v280, 111
      %v392 = vpop.permute.xlu0 %391
      %393 = vrot.lane.b32.xlu0 %v283, 111
      %v394 = vpop.permute.xlu0 %393
      %vm395 = vcmask 908288
      %v396 = vsel %vm395, %v390, %v392
      %v397 = vsel %vm395, %v392, %v394
      %403 = vrot.lane.b32.xlu0 %v321, 110
      %v404 = vpop.permute.xlu0 %403
      %405 = vrot.lane.b32.xlu0 %v322, 110
      %v406 = vpop.permute.xlu0 %405
      %407 = vrot.lane.b32.xlu0 %v323, 110
      %v408 = vpop.permute.xlu0 %407
      %vm409 = vcmask 900096
      %v410 = vsel %vm409, %v404, %v406
      %v411 = vsel %vm409, %v406, %v408
      %417 = vrot.lane.b32.xlu0 %v333, 96
      %v418 = vpop.permute.xlu0 %417
      %419 = vrot.lane.b32.xlu0 %v334, 96
      %v420 = vpop.permute.xlu0 %419
      %421 = vrot.lane.b32.xlu0 %v335, 96
      %v422 = vpop.permute.xlu0 %421
      %vm423 = vcmask 785408
      %v424 = vsel %vm423, %v418, %v420
      %v425 = vsel %vm423, %v420, %v422
      %428 = vrot.lane.b32.xlu0 %v279, 95
      %v429 = vpop.permute.xlu0 %428
      %430 = vrot.lane.b32.xlu0 %v280, 95
      %v431 = vpop.permute.xlu0 %430
      %432 = vrot.lane.b32.xlu0 %v283, 95
      %v433 = vpop.permute.xlu0 %432
      %vm434 = vcmask 777216
      %v435 = vsel %vm434, %v429, %v431
      %v436 = vsel %vm434, %v431, %v433
      %442 = vrot.lane.b32.xlu0 %v344, 94
      %v443 = vpop.permute.xlu0 %442
      %444 = vrot.lane.b32.xlu0 %v345, 94
      %v445 = vpop.permute.xlu0 %444
      %446 = vrot.lane.b32.xlu0 %v346, 94
      %v447 = vpop.permute.xlu0 %446
      %vm448 = vcmask 769024
      %v449 = vsel %vm448, %v443, %v445
      %v450 = vsel %vm448, %v445, %v447
      %vm453 = vcmask 588800
      %v455 = vsel %vm453, %v262, 0
      %v458 = vsel %vm453, %v263, 0
      %460 = vmatpush.msra.mxu0 0.0
      %461 = vmatpush.msra.mxu0 0.0
      %462 = vmatpush.msra.mxu0 0.0
      %463 = vmatpush.msra.mxu0 0.0
      %464 = vmatpush.msra.mxu0 0.0
      %465 = vmatpush.msra.mxu0 0.0
      %466 = vmatpush.msra.mxu0 0.0
      %467 = vmatpush.msra.mxu0 %v449
      %468 = vmatpush.msra.mxu0 %v435
      %469 = vmatpush.msra.mxu0 %v424
      %470 = vmatpush.msra.mxu0 %v410
      %471 = vmatpush.msra.mxu0 %v396
      %472 = vmatpush.msra.mxu0 %v385
      %473 = vmatpush.msra.mxu0 %v371
      %474 = vmatpush.msra.mxu0 %v357
      %475 = vmatpush.msra.mxu0 %v281
      %476 = vmatmul.f32.gmra.mxu0 %v455
      %v477 = vpop.f32.mrf.mxu0
      %v478 = vadd.f32 0.0, %v477
      %479 = vmatmul.f32.gmra.mxu0 %v458
      %v480 = vpop.f32.mrf.mxu0
      %v481 = vadd.f32 0.0, %v480
      %482 = vdwg.mxu0
      %483 = vmatpush.msra.mxu0 0.0
      %484 = vmatpush.msra.mxu0 0.0
      %485 = vmatpush.msra.mxu0 0.0
      %486 = vmatpush.msra.mxu0 0.0
      %487 = vmatpush.msra.mxu0 0.0
      %488 = vmatpush.msra.mxu0 0.0
      %489 = vmatpush.msra.mxu0 0.0
      %490 = vmatpush.msra.mxu0 %v450
      %491 = vmatpush.msra.mxu0 %v436
      %492 = vmatpush.msra.mxu0 %v425
      %493 = vmatpush.msra.mxu0 %v411
      %494 = vmatpush.msra.mxu0 %v397
      %495 = vmatpush.msra.mxu0 %v386
      %496 = vmatpush.msra.mxu0 %v372
      %497 = vmatpush.msra.mxu0 %v358
      %498 = vmatpush.msra.mxu0 %v282
      %499 = vmatmul.f32.gmra.mxu0 %v455
      %v500 = vpop.f32.mrf.mxu0
      %v501 = vadd.f32 0.0, %v500
      %502 = vmatmul.f32.gmra.mxu0 %v458
      %v503 = vpop.f32.mrf.mxu0
      %v504 = vadd.f32 0.0, %v503
      %505 = vdwg.mxu0
      %v506 = vmul.f32 %v478, 0.5
      %v507 = vmul.f32 %v501, 0.5
      %v508 = vmul.f32 %v478, 0.70710677
      %v509 = vmul.f32 %v501, 0.70710677
      %vm510 = vcmp.lt.f32.partialorder %v508, 0.0
      %vm511 = vcmp.lt.f32.partialorder %v509, 0.0
      %v512 = vsel %vm510, -1.0, 1.0
      %v513 = vsel %vm511, -1.0, 1.0
      %v514 = vand.u32 2147483647, %v508
      %v515 = vand.u32 2147483647, %v509
      %v516 = vmul.f32 %v514, 0.3275911
      %v517 = vmul.f32 %v515, 0.3275911
      %v518 = vadd.f32 %v516, 1.0
      %v519 = vadd.f32 %v517, 1.0
      %v520 = vrcp.pop %v518
      %v521 = vmul.f32 %v518, %v520
      %v522 = vsub.f32 1.0, %v521
      %v523 = vmul.f32 %v520, %v522
      %v524 = vadd.f32 %v520, %v523
      %vm525 = vweird.f32 %v518
      %vm526 = vweird.f32 %v520
      %vm527 = vmor %vm525, %vm526
      %v528 = vsel %vm527, %v520, %v524
      %v529 = vand.u32 2147483647, %v518
      %vm530 = vcmp.eq.f32.partialorder %v529, 8.507059e+37
      %v531 = vand.u32 %v518, 2147483648
      %v532 = vor.u32 1.1754944e-38, %v531
      %v533 = vsel %vm530, %v532, %v528
      %v534 = vmul.f32 1.0, %v533
      %v535 = vrcp.pop %v519
      %v536 = vmul.f32 %v519, %v535
      %v537 = vsub.f32 1.0, %v536
      %v538 = vmul.f32 %v535, %v537
      %v539 = vadd.f32 %v535, %v538
      %vm540 = vweird.f32 %v519
      %vm541 = vweird.f32 %v535
      %vm542 = vmor %vm540, %vm541
      %v543 = vsel %vm542, %v535, %v539
      %v544 = vand.u32 2147483647, %v519
      %vm545 = vcmp.eq.f32.partialorder %v544, 8.507059e+37
      %v546 = vand.u32 %v519, 2147483648
      %v547 = vor.u32 1.1754944e-38, %v546
      %v548 = vsel %vm545, %v547, %v543
      %v549 = vmul.f32 1.0, %v548
      %v550 = vmul.f32 %v534, 1.0614054
      %v551 = vmul.f32 %v549, 1.0614054
      %v552 = vadd.f32 %v550, -1.4531521
      %v553 = vadd.f32 %v551, -1.4531521
      %v554 = vmul.f32 %v552, %v534
      %v555 = vmul.f32 %v553, %v549
      %v556 = vadd.f32 %v554, 1.4214138
      %v557 = vadd.f32 %v555, 1.4214138
      %v558 = vmul.f32 %v556, %v534
      %v559 = vmul.f32 %v557, %v549
      %v560 = vadd.f32 %v558, -0.28449672
      %v561 = vadd.f32 %v559, -0.28449672
      %v562 = vmul.f32 %v560, %v534
      %v563 = vmul.f32 %v561, %v549
      %v564 = vadd.f32 %v562, 0.2548296
      %v565 = vadd.f32 %v563, 0.2548296
      %v566 = vmul.f32 %v564, %v534
      %v567 = vmul.f32 %v565, %v549
      %v568 = vsub.f32 0.0, %v514
      %v569 = vsub.f32 0.0, %v515
      %v570 = vmul.f32 %v568, %v514
      %v571 = vmul.f32 %v569, %v515
      %v572 = vmul.f32 %v570, 1.442695
      %v573 = vpow.pop %v572
      %v574 = vmul.f32 %v571, 1.442695
      %v575 = vpow.pop %v574
      %v576 = vmul.f32 %v566, %v573
      %v577 = vmul.f32 %v567, %v575
      %v578 = vsub.f32 1.0, %v576
      %v579 = vsub.f32 1.0, %v577
      %v580 = vmul.f32 %v512, %v578
      %v581 = vmul.f32 %v513, %v579
      %v582 = vadd.f32 %v580, 1.0
      %v583 = vadd.f32 %v581, 1.0
      %v584 = vmul.f32 %v506, %v582
      %v585 = vmul.f32 %v507, %v583
      %v586 = vsub.f32 0.0, %v481
      %v587 = vsub.f32 0.0, %v504
      %v588 = vmul.f32 %v586, 1.442695
      %v589 = vpow.pop %v588
      %v590 = vmul.f32 %v587, 1.442695
      %v591 = vpow.pop %v590
      %v592 = vadd.f32 %v589, 1.0
      %v593 = vadd.f32 %v591, 1.0
      %v594 = vrcp.pop %v592
      %v595 = vmul.f32 %v592, %v594
      %v596 = vsub.f32 1.0, %v595
      %v597 = vmul.f32 %v594, %v596
      %v598 = vadd.f32 %v594, %v597
      %vm599 = vweird.f32 %v592
      %vm600 = vweird.f32 %v594
      %vm601 = vmor %vm599, %vm600
      %v602 = vsel %vm601, %v594, %v598
      %v603 = vand.u32 2147483647, %v592
      %vm604 = vcmp.eq.f32.partialorder %v603, 8.507059e+37
      %v605 = vand.u32 %v592, 2147483648
      %v606 = vor.u32 1.1754944e-38, %v605
      %v607 = vsel %vm604, %v606, %v602
      %v608 = vmul.f32 1.0, %v607
      %v609 = vrcp.pop %v593
      %v610 = vmul.f32 %v593, %v609
      %v611 = vsub.f32 1.0, %v610
      %v612 = vmul.f32 %v609, %v611
      %v613 = vadd.f32 %v609, %v612
      %vm614 = vweird.f32 %v593
      %vm615 = vweird.f32 %v609
      %vm616 = vmor %vm614, %vm615
      %v617 = vsel %vm616, %v609, %v613
      %v618 = vand.u32 2147483647, %v593
      %vm619 = vcmp.eq.f32.partialorder %v618, 8.507059e+37
      %v620 = vand.u32 %v593, 2147483648
      %v621 = vor.u32 1.1754944e-38, %v620
      %v622 = vsel %vm619, %v621, %v617
      %v623 = vmul.f32 1.0, %v622
      %v624 = vadd.f32 %v608, %v260
      %v625 = vadd.f32 %v623, %v261
      %v626 = vmul.f32 %v584, %v624
      %v627 = vmul.f32 %v585, %v625
      %v628 = vld [vmem:[%s2] sm:$0xff]
      %v629 = vld [vmem:[%s2 + $0x8] sm:$0xff]
      %632 = vrot.lane.b32.xlu0 %v626, 17
      %v633 = vpop.permute.xlu0 %632
      %634 = vrot.lane.b32.xlu0 %v627, 17
      %v635 = vpop.permute.xlu0 %634
      %v636 = vsel %vm270, %v633, %v635
      %640 = vst.msk [vmem:[#allocation2] sm:$0xff] %vm275, %v633
      %641 = vst [vmem:[#allocation2 + $0x8] sm:$0xff] %v636
      %642 = vst.msk [vmem:[#allocation2 + $0x10] sm:$0xff] %vm270, %v635
      %v643 = vld [vmem:[#allocation2] sm:$0xff]
      %v644 = vld [vmem:[#allocation2 + $0x8] sm:$0xff]
      %v645 = vmul.f32 %v643, %v256
      %v646 = vmul.f32 %v644, %v257
      %v647 = vld [vmem:[#allocation2 + $0x10] sm:$0xff]
      %v648 = vmul.f32 %v643, %v287
      %v649 = vmul.f32 %v644, %v291
      %v650 = vmul.f32 %v647, %v289
      %v651 = vmul.f32 %v643, %v301
      %v652 = vmul.f32 %v644, %v305
      %v653 = vmul.f32 %v647, %v303
      %v654 = vmul.f32 %v643, %v313
      %v655 = vmul.f32 %v644, %v317
      %v656 = vmul.f32 %v647, %v315
      %v657 = vmul.f32 %v643, %v325
      %v658 = vmul.f32 %v644, %v329
      %v659 = vmul.f32 %v647, %v327
      %v660 = vmul.f32 %v643, %v337
      %v661 = vmul.f32 %v644, %v340
      %v662 = vmul.f32 %v647, %v339
      %666 = vrot.lane.b32.xlu0 %v643, 127
      %v667 = vpop.permute.xlu0 %666
      %668 = vrot.lane.b32.xlu0 %v644, 127
      %v669 = vpop.permute.xlu0 %668
      %670 = vrot.lane.b32.xlu0 %v647, 127
      %v671 = vpop.permute.xlu0 %670
      %v672 = vsel %vm356, %v667, %v669
      %v673 = vsel %vm356, %v669, %v671
      %679 = vrot.lane.b32.xlu0 %v648, 126
      %v680 = vpop.permute.xlu0 %679
      %681 = vrot.lane.b32.xlu0 %v649, 126
      %v682 = vpop.permute.xlu0 %681
      %683 = vrot.lane.b32.xlu0 %v650, 126
      %v684 = vpop.permute.xlu0 %683
      %v685 = vsel %vm370, %v680, %v682
      %v686 = vsel %vm370, %v682, %v684
      %692 = vrot.lane.b32.xlu0 %v651, 112
      %v693 = vpop.permute.xlu0 %692
      %694 = vrot.lane.b32.xlu0 %v652, 112
      %v695 = vpop.permute.xlu0 %694
      %696 = vrot.lane.b32.xlu0 %v653, 112
      %v697 = vpop.permute.xlu0 %696
      %v698 = vsel %vm384, %v693, %v695
      %v699 = vsel %vm384, %v695, %v697
      %702 = vrot.lane.b32.xlu0 %v643, 111
      %v703 = vpop.permute.xlu0 %702
      %704 = vrot.lane.b32.xlu0 %v644, 111
      %v705 = vpop.permute.xlu0 %704
      %706 = vrot.lane.b32.xlu0 %v647, 111
      %v707 = vpop.permute.xlu0 %706
      %v708 = vsel %vm395, %v703, %v705
      %v709 = vsel %vm395, %v705, %v707
      %715 = vrot.lane.b32.xlu0 %v654, 110
      %v716 = vpop.permute.xlu0 %715
      %717 = vrot.lane.b32.xlu0 %v655, 110
      %v718 = vpop.permute.xlu0 %717
      %719 = vrot.lane.b32.xlu0 %v656, 110
      %v720 = vpop.permute.xlu0 %719
      %v721 = vsel %vm409, %v716, %v718
      %v722 = vsel %vm409, %v718, %v720
      %728 = vrot.lane.b32.xlu0 %v657, 96
      %v729 = vpop.permute.xlu0 %728
      %730 = vrot.lane.b32.xlu0 %v658, 96
      %v731 = vpop.permute.xlu0 %730
      %732 = vrot.lane.b32.xlu0 %v659, 96
      %v733 = vpop.permute.xlu0 %732
      %v734 = vsel %vm423, %v729, %v731
      %v735 = vsel %vm423, %v731, %v733
      %738 = vrot.lane.b32.xlu0 %v643, 95
      %v739 = vpop.permute.xlu0 %738
      %740 = vrot.lane.b32.xlu0 %v644, 95
      %v741 = vpop.permute.xlu0 %740
      %742 = vrot.lane.b32.xlu0 %v647, 95
      %v743 = vpop.permute.xlu0 %742
      %v744 = vsel %vm434, %v739, %v741
      %v745 = vsel %vm434, %v741, %v743
      %751 = vrot.lane.b32.xlu0 %v660, 94
      %v752 = vpop.permute.xlu0 %751
      %753 = vrot.lane.b32.xlu0 %v661, 94
      %v754 = vpop.permute.xlu0 %753
      %755 = vrot.lane.b32.xlu0 %v662, 94
      %v756 = vpop.permute.xlu0 %755
      %v757 = vsel %vm448, %v752, %v754
      %v758 = vsel %vm448, %v754, %v756
      %v762 = vsel %vm453, %v628, 0
      %v765 = vsel %vm453, %v629, 0
      %767 = vmatpush.msra.mxu0 0.0
      %768 = vmatpush.msra.mxu0 0.0
      %769 = vmatpush.msra.mxu0 0.0
      %770 = vmatpush.msra.mxu0 0.0
      %771 = vmatpush.msra.mxu0 0.0
      %772 = vmatpush.msra.mxu0 0.0
      %773 = vmatpush.msra.mxu0 0.0
      %774 = vmatpush.msra.mxu0 %v757
      %775 = vmatpush.msra.mxu0 %v744
      %776 = vmatpush.msra.mxu0 %v734
      %777 = vmatpush.msra.mxu0 %v721
      %778 = vmatpush.msra.mxu0 %v708
      %779 = vmatpush.msra.mxu0 %v698
      %780 = vmatpush.msra.mxu0 %v685
      %781 = vmatpush.msra.mxu0 %v672
      %782 = vmatpush.msra.mxu0 %v645
      %783 = vmatmul.f32.gmra.mxu0 %v762
      %v784 = vpop.f32.mrf.mxu0
      %v785 = vadd.f32 0.0, %v784
      %786 = vmatmul.f32.gmra.mxu0 %v765
      %v787 = vpop.f32.mrf.mxu0
      %v788 = vadd.f32 0.0, %v787
      %789 = vdwg.mxu0
      %790 = vmatpush.msra.mxu0 0.0
      %791 = vmatpush.msra.mxu0 0.0
      %792 = vmatpush.msra.mxu0 0.0
      %793 = vmatpush.msra.mxu0 0.0
      %794 = vmatpush.msra.mxu0 0.0
      %795 = vmatpush.msra.mxu0 0.0
      %796 = vmatpush.msra.mxu0 0.0
      %797 = vmatpush.msra.mxu0 %v758
      %798 = vmatpush.msra.mxu0 %v745
      %799 = vmatpush.msra.mxu0 %v735
      %800 = vmatpush.msra.mxu0 %v722
      %801 = vmatpush.msra.mxu0 %v709
      %802 = vmatpush.msra.mxu0 %v699
      %803 = vmatpush.msra.mxu0 %v686
      %804 = vmatpush.msra.mxu0 %v673
      %805 = vmatpush.msra.mxu0 %v646
      %806 = vmatmul.f32.gmra.mxu0 %v762
      %v807 = vpop.f32.mrf.mxu0
      %v808 = vadd.f32 0.0, %v807
      %809 = vmatmul.f32.gmra.mxu0 %v765
      %v810 = vpop.f32.mrf.mxu0
      %v811 = vadd.f32 0.0, %v810
      %812 = vdwg.mxu0
      %v813 = vsub.f32 0.0, %v785
      %v814 = vsub.f32 0.0, %v808
      %v815 = vmul.f32 %v813, 1.442695
      %v816 = vpow.pop %v815
      %v817 = vmul.f32 %v814, 1.442695
      %v818 = vpow.pop %v817
      %v819 = vadd.f32 %v816, 1.0
      %v820 = vadd.f32 %v818, 1.0
      %v821 = vrcp.pop %v819
      %v822 = vmul.f32 %v819, %v821
      %v823 = vsub.f32 1.0, %v822
      %v824 = vmul.f32 %v821, %v823
      %v825 = vadd.f32 %v821, %v824
      %vm826 = vweird.f32 %v819
      %vm827 = vweird.f32 %v821
      %vm828 = vmor %vm826, %vm827
      %v829 = vsel %vm828, %v821, %v825
      %v830 = vand.u32 2147483647, %v819
      %vm831 = vcmp.eq.f32.partialorder %v830, 8.507059e+37
      %v832 = vand.u32 %v819, 2147483648
      %v833 = vor.u32 1.1754944e-38, %v832
      %v834 = vsel %vm831, %v833, %v829
      %v835 = vmul.f32 1.0, %v834
      %v836 = vrcp.pop %v820
      %v837 = vmul.f32 %v820, %v836
      %v838 = vsub.f32 1.0, %v837
      %v839 = vmul.f32 %v836, %v838
      %v840 = vadd.f32 %v836, %v839
      %vm841 = vweird.f32 %v820
      %vm842 = vweird.f32 %v836
      %vm843 = vmor %vm841, %vm842
      %v844 = vsel %vm843, %v836, %v840
      %v845 = vand.u32 2147483647, %v820
      %vm846 = vcmp.eq.f32.partialorder %v845, 8.507059e+37
      %v847 = vand.u32 %v820, 2147483648
      %v848 = vor.u32 1.1754944e-38, %v847
      %v849 = vsel %vm846, %v848, %v844
      %v850 = vmul.f32 1.0, %v849
      %v851 = vadd.f32 %v835, %v626
      %v852 = vadd.f32 %v850, %v627
      %v853 = vmul.f32 %v788, 0.5
      %v854 = vmul.f32 %v811, 0.5
      %v855 = vmul.f32 %v788, 0.70710677
      %v856 = vmul.f32 %v811, 0.70710677
      %vm857 = vcmp.lt.f32.partialorder %v855, 0.0
      %vm858 = vcmp.lt.f32.partialorder %v856, 0.0
      %v859 = vsel %vm857, -1.0, 1.0
      %v860 = vsel %vm858, -1.0, 1.0
      %v861 = vand.u32 2147483647, %v855
      %v862 = vand.u32 2147483647, %v856
      %v863 = vmul.f32 %v861, 0.3275911
      %v864 = vmul.f32 %v862, 0.3275911
      %v865 = vadd.f32 %v863, 1.0
      %v866 = vadd.f32 %v864, 1.0
      %v867 = vrcp.pop %v865
      %v868 = vmul.f32 %v865, %v867
      %v869 = vsub.f32 1.0, %v868
      %v870 = vmul.f32 %v867, %v869
      %v871 = vadd.f32 %v867, %v870
      %vm872 = vweird.f32 %v865
      %vm873 = vweird.f32 %v867
      %vm874 = vmor %vm872, %vm873
      %v875 = vsel %vm874, %v867, %v871
      %v876 = vand.u32 2147483647, %v865
      %vm877 = vcmp.eq.f32.partialorder %v876, 8.507059e+37
      %v878 = vand.u32 %v865, 2147483648
      %v879 = vor.u32 1.1754944e-38, %v878
      %v880 = vsel %vm877, %v879, %v875
      %v881 = vmul.f32 1.0, %v880
      %v882 = vrcp.pop %v866
      %v883 = vmul.f32 %v866, %v882
      %v884 = vsub.f32 1.0, %v883
      %v885 = vmul.f32 %v882, %v884
      %v886 = vadd.f32 %v882, %v885
      %vm887 = vweird.f32 %v866
      %vm888 = vweird.f32 %v882
      %vm889 = vmor %vm887, %vm888
      %v890 = vsel %vm889, %v882, %v886
      %v891 = vand.u32 2147483647, %v866
      %vm892 = vcmp.eq.f32.partialorder %v891, 8.507059e+37
      %v893 = vand.u32 %v866, 2147483648
      %v894 = vor.u32 1.1754944e-38, %v893
      %v895 = vsel %vm892, %v894, %v890
      %v896 = vmul.f32 1.0, %v895
      %v897 = vmul.f32 %v881, 1.0614054
      %v898 = vmul.f32 %v896, 1.0614054
      %v899 = vadd.f32 %v897, -1.4531521
      %v900 = vadd.f32 %v898, -1.4531521
      %v901 = vmul.f32 %v899, %v881
      %v902 = vmul.f32 %v900, %v896
      %v903 = vadd.f32 %v901, 1.4214138
      %v904 = vadd.f32 %v902, 1.4214138
      %v905 = vmul.f32 %v903, %v881
      %v906 = vmul.f32 %v904, %v896
      %v907 = vadd.f32 %v905, -0.28449672
      %v908 = vadd.f32 %v906, -0.28449672
      %v909 = vmul.f32 %v907, %v881
      %v910 = vmul.f32 %v908, %v896
      %v911 = vadd.f32 %v909, 0.2548296
      %v912 = vadd.f32 %v910, 0.2548296
      %v913 = vmul.f32 %v911, %v881
      %v914 = vmul.f32 %v912, %v896
      %v915 = vsub.f32 0.0, %v861
      %v916 = vsub.f32 0.0, %v862
      %v917 = vmul.f32 %v915, %v861
      %v918 = vmul.f32 %v916, %v862
      %v919 = vmul.f32 %v917, 1.442695
      %v920 = vpow.pop %v919
      %v921 = vmul.f32 %v918, 1.442695
      %v922 = vpow.pop %v921
      %v923 = vmul.f32 %v913, %v920
      %v924 = vmul.f32 %v914, %v922
      %v925 = vsub.f32 1.0, %v923
      %v926 = vsub.f32 1.0, %v924
      %v927 = vmul.f32 %v859, %v925
      %v928 = vmul.f32 %v860, %v926
      %v929 = vadd.f32 %v927, 1.0
      %v930 = vadd.f32 %v928, 1.0
      %v931 = vmul.f32 %v853, %v929
      %v932 = vmul.f32 %v854, %v930
      %v933 = vld [vmem:[%s3] sm:$0xff]
      %v935 = vsel %vm304, %v933, 0
      %937 = vmatpush.msra.mxu0 0.0
      %938 = vmatpush.msra.mxu0 0.0
      %939 = vmatpush.msra.mxu0 0.0
      %940 = vmatpush.msra.mxu0 0.0
      %941 = vmatpush.msra.mxu0 0.0
      %942 = vmatpush.msra.mxu0 0.0
      %943 = vmatpush.msra.mxu0 0.0
      %944 = vmatpush.msra.mxu0 0.0
      %945 = vmatpush.msra.mxu0 0.0
      %946 = vmatpush.msra.mxu0 0.0
      %947 = vmatpush.msra.mxu0 0.0
      %948 = vmatpush.msra.mxu0 0.0
      %949 = vmatpush.msra.mxu0 0.0
      %950 = vmatpush.msra.mxu0 0.0
      %951 = vmatpush.msra.mxu0 %v931
      %952 = vmatpush.msra.mxu0 %v851
      %953 = vmatmul.f32.gmra.mxu0 %v935
      %v954 = vpop.f32.mrf.mxu0
      %v955 = vadd.f32 0.0, %v954
      %956 = vdwg.mxu0
      %957 = vmatpush.msra.mxu0 0.0
      %958 = vmatpush.msra.mxu0 0.0
      %959 = vmatpush.msra.mxu0 0.0
      %960 = vmatpush.msra.mxu0 0.0
      %961 = vmatpush.msra.mxu0 0.0
      %962 = vmatpush.msra.mxu0 0.0
      %963 = vmatpush.msra.mxu0 0.0
      %964 = vmatpush.msra.mxu0 0.0
      %965 = vmatpush.msra.mxu0 0.0
      %966 = vmatpush.msra.mxu0 0.0
      %967 = vmatpush.msra.mxu0 0.0
      %968 = vmatpush.msra.mxu0 0.0
      %969 = vmatpush.msra.mxu0 0.0
      %970 = vmatpush.msra.mxu0 0.0
      %971 = vmatpush.msra.mxu0 %v932
      %972 = vmatpush.msra.mxu0 %v852
      %973 = vmatmul.f32.gmra.mxu0 %v935
      %v974 = vpop.f32.mrf.mxu0
      %v975 = vadd.f32 0.0, %v974
      %976 = vdwg.mxu0
      %977 = vst [vmem:[%s251] sm:$0xff] %v955
      %978 = vst [vmem:[%s251 + $0x8] sm:$0xff] %v975
      %p979 = scmp.lt.s32.totalorder %s17, 1
      %s980 = scalar_select %p979, %s17, 1
      %s981 = smul.addr %s980, 2
      %s982 = smul.addr %s981, 8
      %s983 = scalar_lea.vmem %s6, %s982
      // Predicated region
      $region45: #{stage_denoiser.1} parent=43 // pred_check
        %p984 = pneg %p166
      $region46: #{stage_denoiser.1} parent=43 // pred_check_branch
        %986 = sbr.rel (%p984) target = $region48
      $region47: #{stage_denoiser.1} parent=43 // pred_region
        _
      $region48: #{stage_denoiser.1} parent=43 // pred_fallthru
        _
    $region44: #{stage_denoiser.1} parent=5 // pred_fallthru
      _
    %p987 = scmp.le.s32.totalorder 2, %s12
    // Predicated region
    $region49: #{stage_denoiser.1} parent=5 // pred_check
      %p988 = pneg %p987
    $region50: #{stage_denoiser.1} parent=5 // pred_check_branch
      %990 = sbr.rel (%p988) target = $region52
    $region51: #{stage_denoiser.1} parent=5 // pred_region
      %s991 = ssub.s32 %s12, 2
      // Predicated region
      $region53: #{stage_denoiser.1} parent=51 // pred_check
        %p992 = pneg %p172
      $region54: #{stage_denoiser.1} parent=51 // pred_check_branch
        %994 = sbr.rel (%p992) target = $region56
      $region55: #{stage_denoiser.1} parent=51 // pred_region
        %p995 = scmp.lt.s32.totalorder %s18, 1
        %s996 = scalar_select %p995, %s18, 1
        %s997 = smul.addr %s996, 2
        %s998 = smul.addr %s997, 8
        %s999 = scalar_lea.vmem %s6, %s998
      $region56: #{stage_denoiser.1} parent=51 // pred_fallthru
        _
    $region52: #{stage_denoiser.1} parent=5 // pred_fallthru
      _
  $region6: #{stage_denoiser.1} parent=0 // loop_footer
    %s16 = sadd.s32 1, %s12
  $region7: #{stage_denoiser.1} parent=0 // loop_footer_branch
    %11 = sbr.rel target = $region3
  $region8: #{stage_denoiser.1} parent=0 // loop_exit
    _

</llo_original>
